<compile_context>
chip_gen: v6e
topology: v6e:2x2x1
jax: 0.10.0
libtpu: 0.0.40
codegen_flags: <defaults>
</compile_context>

<pallas_src>
import jax
import jax.numpy as jnp
from jax.experimental import pallas as pl
from jax.experimental.pallas import tpu as pltpu


# ----------------------------- Pallas kernel --------------------------------

def _make_half_upper_kernel(parts, hid):
    """Kernel for a fixed number of part tensors.

    Ref layout (inputs..., output, scratch):
      refs[0:parts]   xp_k  (hid, TP)            part features, channel-major
      refs[parts+0]   xh_u  (c_out, TP)          residual
      refs[parts+1]   xfh   (c_out, TP)          residual
      refs[parts+2]   w1    (c_mid, parts*hid)   BN1-folded conv1 weight
      refs[parts+3]   b1    (c_mid, 1)
      refs[parts+4]   w2    (c_out, c_mid)       BN2-folded conv2 weight
      refs[parts+5]   b2    (c_out, 1)
      refs[parts+6]   out   (c_out, TP)
      refs[parts+7]   xcat  (parts*hid, TP)      VMEM scratch (in-kernel concat)
    """

    def kernel(*refs):
        xp_refs = refs[:parts]
        (xh_u_ref, xfh_ref, w1_ref, b1_ref, w2_ref, b2_ref,
         o_ref, xcat_ref) = refs[parts:]

        # Rebuild the channel concat in VMEM (never materialized in HBM), then
        # run ONE K = parts*hid matmul: a single MXU weight stage and ~parts x
        # fewer vmatmul pushes than `parts` chained small-K dots.
        for k in range(parts):
            xcat_ref[pl.ds(k * hid, hid), :] = xp_refs[k][...]

        h = jnp.dot(w1_ref[...], xcat_ref[...],
                    preferred_element_type=jnp.float32)
        h = jnp.maximum(h + b1_ref[...], 0.0)                 # BN1 bias + ReLU

        y = jnp.dot(w2_ref[...], h.astype(w2_ref.dtype),
                    preferred_element_type=jnp.float32)
        y = jnp.maximum(y + b2_ref[...], 0.0)                 # BN2 bias + ReLU

        # residual adds in f32, single lane-dense store
        o_ref[...] = (y + xh_u_ref[...].astype(jnp.float32)
                      + xfh_ref[...].astype(jnp.float32)).astype(o_ref.dtype)

    return kernel


# ----------------------------- tiling helper ---------------------------------

def _round_up(x, m):
    return ((x + m - 1) // m) * m


def _choose_pixel_tile(hw, n_batch, *, max_tp=8192, min_tp=512, target_steps=8):
    """Fixed lane-aligned pixel tile (no divisor constraint, no padding).

    Large tiles keep HBM DMAs near roofline; the step-count floor keeps both
    TensorCores busy on v7x and the double-buffer pipeline full.  The final
    partial block (when hw % tp != 0) is masked by Pallas.
    """
    hw_lanes = _round_up(hw, 128)
    tp = min(max_tp, hw_lanes)
    while tp > min_tp and n_batch * pl.cdiv(hw, tp) < target_steps:
        tp = max(min_tp, _round_up(tp // 2, 128))
    return tp


# ----------------------------- pallas_call wrapper ---------------------------

def _fused_graph_conv(xps, xh_u, xfh, w1, b1, w2, b2, *, tp, cost):
    """xps: list of (N, hid, HW) arrays; residuals: (N, c_out, HW)."""
    parts = len(xps)
    n, hid, hw = xps[0].shape
    c_out, c_mid = w2.shape
    c_in = w1.shape[1]

    grid = (n, pl.cdiv(hw, tp))      # partial final pixel block handled by Pallas

    part_spec = pl.BlockSpec((None, hid, tp), lambda b, j: (b, 0, j))
    res_spec = pl.BlockSpec((None, c_out, tp), lambda b, j: (b, 0, j))
    in_specs = (
        [part_spec] * parts
        + [res_spec,                                            # xh_u
           res_spec,                                            # xfh
           pl.BlockSpec((c_mid, c_in), lambda b, j: (0, 0)),    # w1
           pl.BlockSpec((c_mid, 1), lambda b, j: (0, 0)),       # b1
           pl.BlockSpec((c_out, c_mid), lambda b, j: (0, 0)),   # w2
           pl.BlockSpec((c_out, 1), lambda b, j: (0, 0))]       # b2
    )
    out_spec = pl.BlockSpec((None, c_out, tp), lambda b, j: (b, 0, j))

    return pl.pallas_call(
        _make_half_upper_kernel(parts, hid),
        out_shape=jax.ShapeDtypeStruct((n, c_out, hw), xh_u.dtype),
        grid_spec=pltpu.PrefetchScalarGridSpec(
            num_scalar_prefetch=0,
            grid=grid,
            in_specs=in_specs,
            out_specs=out_spec,
            scratch_shapes=[pltpu.VMEM((c_in, tp), xps[0].dtype)],
        ),
        compiler_params=pltpu.CompilerParams(
            dimension_semantics=("parallel", "parallel")),
        cost_estimate=cost,
    )(*xps, xh_u, xfh, w1, b1, w2, b2)


# --------------------------- module-level wrapper ----------------------------

class HalfUpperGraphPallas:
    """JAX/Pallas re-implementation of Half_upper_Graph."""

    def __init__(self, part_list=(1, 2, 3, 4), in_dim=256, hidden_dim=10,
                 cls_p=7, cls_h=3, cls_f=2, key=None, eps=1e-5):
        self.part_list = [int(i) for i in part_list]
        self.parts = len(self.part_list)
        self.hidden_dim = hidden_dim
        c_in = self.parts * hidden_dim       # 40
        c_mid = 2 * hidden_dim               # 20
        c_out = hidden_dim                   # 10
        self.c_in, self.c_mid, self.c_out = c_in, c_mid, c_out

        if key is None:
            key = jax.random.PRNGKey(42)
        k1, k2, k3, k4, k5, k6 = jax.random.split(key, 6)

        # Conv2d weights (out, in, 1, 1) -> (out, in) matmul weights.
        w1_oi = jax.random.normal(k1, (c_mid, c_in), jnp.float32) * 0.1
        w2_oi = jax.random.normal(k2, (c_out, c_mid), jnp.float32) * 0.1

        # BatchNorm (InPlaceABNSync, activation='none'), eval-style fold.
        # TODO(synk): running stats are placeholders (mean=0, var=1); fold real
        # trained running_mean/var before deployment.
        g1 = 1.0 + 0.1 * jax.random.normal(k3, (c_mid,), jnp.float32)
        be1 = 0.1 * jax.random.normal(k4, (c_mid,), jnp.float32)
        mu1 = jnp.zeros((c_mid,), jnp.float32)
        var1 = jnp.ones((c_mid,), jnp.float32)
        g2 = 1.0 + 0.1 * jax.random.normal(k5, (c_out,), jnp.float32)
        be2 = 0.1 * jax.random.normal(k6, (c_out,), jnp.float32)
        mu2 = jnp.zeros((c_out,), jnp.float32)
        var2 = jnp.ones((c_out,), jnp.float32)

        s1 = g1 / jnp.sqrt(var1 + eps)
        s2 = g2 / jnp.sqrt(var2 + eps)

        # Fold BN scales into the conv weights; keep only the biases (f32).
        # Column order of w1_full matches the in-kernel concat (part_list order).
        self.w1_full = w1_oi * s1[:, None]                     # (c_mid, c_in)
        self.w2 = w2_oi * s2[:, None]                          # (c_out, c_mid)
        self.b1 = (be1 - mu1 * s1).reshape(c_mid, 1)           # (c_mid, 1)
        self.b2 = (be2 - mu2 * s2).reshape(c_out, 1)           # (c_out, 1)

    def __call__(self, h_fea, xh_u, xh_l, xfh, xp_list):
        # h_fea, xh_l are unused (matches the PyTorch forward).
        del h_fea, xh_l
        part_arrs = [xp_list[p] for p in self.part_list]

        n, _, H, W = xh_u.shape
        hw = H * W
        tp = _choose_pixel_tile(hw, n)

        def flat(a):                         # free reshape, no transpose
            return a.reshape(a.shape[0], a.shape[1], hw)

        xps = [flat(a) for a in part_arrs]
        xh_u_f = flat(xh_u)
        xfh_f = flat(xfh)

        # Compute dtype follows the activations (bf16 inputs feed the MXU
        # directly); the epilogue stays f32 inside the kernel.
        cdt = xps[0].dtype
        w1 = self.w1_full.astype(cdt)
        w2 = self.w2.astype(cdt)

        itemsize = jnp.dtype(cdt).itemsize
        out_itemsize = jnp.dtype(xh_u.dtype).itemsize
        bytes_accessed = (
            n * hw * (self.c_in + 2 * self.c_out) * itemsize      # activations in
            + n * hw * self.c_out * out_itemsize                  # output
            + (self.c_mid * self.c_in + self.c_out * self.c_mid
               + self.c_mid + self.c_out) * 4)                    # weights/biases
        flops = 2 * n * hw * (self.c_mid * self.c_in + self.c_out * self.c_mid)
        cost = pl.CostEstimate(flops=flops, transcendentals=0,
                               bytes_accessed=bytes_accessed)

        out_f = _fused_graph_conv(xps, xh_u_f, xfh_f, w1, self.b1, w2, self.b2,
                                  tp=tp, cost=cost)               # (N, c_out, hw)
        return out_f.reshape(n, self.c_out, H, W)                 # already NCHW


# --------------------------------- demo --------------------------------------

def _reference(module, xh_u, xfh, xp_list):
    """Plain-JAX reference for numerical sanity check."""
    x = jnp.concatenate([xp_list[p] for p in module.part_list], axis=1)
    N, c_in, H, W = x.shape
    xr = x.reshape(N, c_in, H * W)
    h = jnp.maximum(jnp.einsum('oi,nip->nop', module.w1_full, xr)
                    + module.b1[None], 0.0)
    y = jnp.maximum(jnp.einsum('oi,nip->nop', module.w2, h)
                    + module.b2[None], 0.0)
    return xh_u + y.reshape(N, module.c_out, H, W) + xfh


if __name__ == "__main__":
    key = jax.random.PRNGKey(0)
    N, hid, H, W, cls_p = 2, 10, 16, 16, 7

    keys = jax.random.split(key, cls_p + 4)
    h_fea = jax.random.normal(keys[0], (N, 256, H, W), jnp.float32)   # unused
    xh_u = jax.random.normal(keys[1], (N, hid, H, W), jnp.float32)
    xh_l = jax.random.normal(keys[2], (N, hid, H, W), jnp.float32)    # unused
    xfh = jax.random.normal(keys[3], (N, hid, H, W), jnp.float32)
    xp_list = [jax.random.normal(keys[4 + i], (N, hid, H, W), jnp.float32)
               for i in range(cls_p)]

    module = HalfUpperGraphPallas(part_list=[1, 2, 3, 4], hidden_dim=hid,
                                  cls_p=cls_p, key=jax.random.PRNGKey(42))

    out = module(h_fea, xh_u, xh_l, xfh, xp_list)
    out = jax.block_until_ready(out)

    ref = _reference(module, xh_u, xfh, xp_list)
    assert out.shape == (N, hid, H, W)
    assert jnp.allclose(out, ref, atol=1e-4, rtol=1e-4), "mismatch vs reference"

    print("KERNEL_OK")
</pallas_src>

<mosaic_0001>
module attributes {stable_mosaic.version = 11 : i64} {
  func.func @kernel(%arg0: i32, %arg1: i32, %arg2: memref<1x10x256xf32, #tpu.memory_space<vmem>>, %arg3: memref<1x10x256xf32, #tpu.memory_space<vmem>>, %arg4: memref<1x10x256xf32, #tpu.memory_space<vmem>>, %arg5: memref<1x10x256xf32, #tpu.memory_space<vmem>>, %arg6: memref<1x10x256xf32, #tpu.memory_space<vmem>>, %arg7: memref<1x10x256xf32, #tpu.memory_space<vmem>>, %arg8: memref<20x40xf32, #tpu.memory_space<vmem>>, %arg9: memref<20x1xf32, #tpu.memory_space<vmem>>, %arg10: memref<10x20xf32, #tpu.memory_space<vmem>>, %arg11: memref<10x1xf32, #tpu.memory_space<vmem>>, %arg12: memref<1x10x256xf32, #tpu.memory_space<vmem>>, %arg13: memref<40x256xf32, #tpu.memory_space<vmem>>) attributes {dimension_semantics = [#tpu.dimension_semantics<parallel>, #tpu.dimension_semantics<parallel>], iteration_bounds = array<i64: 2, 1>, scalar_prefetch = 0 : i64, scratch_operands = 1 : i64, tpu.core_type = #tpu.core_type<tc>, window_params = [{transform_indices = @transform_0, window_bounds = array<i64: 1, 10, 256>}, {transform_indices = @transform_1, window_bounds = array<i64: 1, 10, 256>}, {transform_indices = @transform_2, window_bounds = array<i64: 1, 10, 256>}, {transform_indices = @transform_3, window_bounds = array<i64: 1, 10, 256>}, {transform_indices = @transform_4, window_bounds = array<i64: 1, 10, 256>}, {transform_indices = @transform_5, window_bounds = array<i64: 1, 10, 256>}, {pipeline_mode = #tpu.pipeline_mode<synchronous>, transform_indices = @transform_6, window_bounds = array<i64: 20, 40>}, {pipeline_mode = #tpu.pipeline_mode<synchronous>, transform_indices = @transform_7, window_bounds = array<i64: 20, 1>}, {pipeline_mode = #tpu.pipeline_mode<synchronous>, transform_indices = @transform_8, window_bounds = array<i64: 10, 20>}, {pipeline_mode = #tpu.pipeline_mode<synchronous>, transform_indices = @transform_9, window_bounds = array<i64: 10, 1>}, {transform_indices = @transform_10, window_bounds = array<i64: 1, 10, 256>}]} {
    %c0 = arith.constant 0 : index
    %c0_0 = arith.constant 0 : index
    %c0_1 = arith.constant 0 : index
    %0 = vector.load %arg2[%c0, %c0_0, %c0_1] : memref<1x10x256xf32, #tpu.memory_space<vmem>>, vector<1x10x256xf32>
    %1 = vector.shape_cast %0 : vector<1x10x256xf32> to vector<10x256xf32>
    %c0_2 = arith.constant 0 : index
    %c0_3 = arith.constant 0 : index
    %2 = vector.load %arg13[%c0_2, %c0_3] : memref<40x256xf32, #tpu.memory_space<vmem>>, vector<10x256xf32>
    tpu.vector_store %arg13[%c0_2, %c0_3], %1 {strides = array<i32>} : memref<40x256xf32, #tpu.memory_space<vmem>>, vector<10x256xf32>,
    %c0_4 = arith.constant 0 : index
    %c0_5 = arith.constant 0 : index
    %c0_6 = arith.constant 0 : index
    %3 = vector.load %arg3[%c0_4, %c0_5, %c0_6] : memref<1x10x256xf32, #tpu.memory_space<vmem>>, vector<1x10x256xf32>
    %4 = vector.shape_cast %3 : vector<1x10x256xf32> to vector<10x256xf32>
    %c10 = arith.constant 10 : index
    %c0_7 = arith.constant 0 : index
    %5 = vector.load %arg13[%c10, %c0_7] : memref<40x256xf32, #tpu.memory_space<vmem>>, vector<10x256xf32>
    tpu.vector_store %arg13[%c10, %c0_7], %4 {strides = array<i32>} : memref<40x256xf32, #tpu.memory_space<vmem>>, vector<10x256xf32>,
    %c0_8 = arith.constant 0 : index
    %c0_9 = arith.constant 0 : index
    %c0_10 = arith.constant 0 : index
    %6 = vector.load %arg4[%c0_8, %c0_9, %c0_10] : memref<1x10x256xf32, #tpu.memory_space<vmem>>, vector<1x10x256xf32>
    %7 = vector.shape_cast %6 : vector<1x10x256xf32> to vector<10x256xf32>
    %c20 = arith.constant 20 : index
    %c0_11 = arith.constant 0 : index
    %8 = vector.load %arg13[%c20, %c0_11] : memref<40x256xf32, #tpu.memory_space<vmem>>, vector<10x256xf32>
    tpu.vector_store %arg13[%c20, %c0_11], %7 {strides = array<i32>} : memref<40x256xf32, #tpu.memory_space<vmem>>, vector<10x256xf32>,
    %c0_12 = arith.constant 0 : index
    %c0_13 = arith.constant 0 : index
    %c0_14 = arith.constant 0 : index
    %9 = vector.load %arg5[%c0_12, %c0_13, %c0_14] : memref<1x10x256xf32, #tpu.memory_space<vmem>>, vector<1x10x256xf32>
    %10 = vector.shape_cast %9 : vector<1x10x256xf32> to vector<10x256xf32>
    %c30 = arith.constant 30 : index
    %c0_15 = arith.constant 0 : index
    %11 = vector.load %arg13[%c30, %c0_15] : memref<40x256xf32, #tpu.memory_space<vmem>>, vector<10x256xf32>
    tpu.vector_store %arg13[%c30, %c0_15], %10 {strides = array<i32>} : memref<40x256xf32, #tpu.memory_space<vmem>>, vector<10x256xf32>,
    %c0_16 = arith.constant 0 : index
    %c0_17 = arith.constant 0 : index
    %12 = vector.load %arg8[%c0_16, %c0_17] : memref<20x40xf32, #tpu.memory_space<vmem>>, vector<20x40xf32>
    %c0_18 = arith.constant 0 : index
    %c0_19 = arith.constant 0 : index
    %13 = vector.load %arg13[%c0_18, %c0_19] : memref<40x256xf32, #tpu.memory_space<vmem>>, vector<40x256xf32>
    %cst = arith.constant dense<0.000000e+00> : vector<20x256xf32>
    %14 = tpu.matmul %12, %13, %cst {dimension_numbers = #tpu.dot_dimension_numbers<[1], [0], [0], [1], [0, 0, 1, 1], [], []>} : vector<20x40xf32>, vector<40x256xf32>, vector<20x256xf32> -> vector<20x256xf32>
    %c0_20 = arith.constant 0 : index
    %c0_21 = arith.constant 0 : index
    %15 = vector.load %arg9[%c0_20, %c0_21] : memref<20x1xf32, #tpu.memory_space<vmem>>, vector<20x1xf32>
    %16 = vector.broadcast %15 : vector<20x1xf32> to vector<20x256xf32>
    %17 = arith.addf %14, %16 : vector<20x256xf32>
    %cst_22 = arith.constant 0.000000e+00 : f32
    %18 = vector.broadcast %cst_22 : f32 to vector<20x256xf32>
    %19 = arith.maximumf %17, %18 : vector<20x256xf32>
    %c0_23 = arith.constant 0 : index
    %c0_24 = arith.constant 0 : index
    %20 = vector.load %arg10[%c0_23, %c0_24] : memref<10x20xf32, #tpu.memory_space<vmem>>, vector<10x20xf32>
    %cst_25 = arith.constant dense<0.000000e+00> : vector<10x256xf32>
    %21 = tpu.matmul %20, %19, %cst_25 {dimension_numbers = #tpu.dot_dimension_numbers<[1], [0], [0], [1], [0, 0, 1, 1], [], []>} : vector<10x20xf32>, vector<20x256xf32>, vector<10x256xf32> -> vector<10x256xf32>
    %c0_26 = arith.constant 0 : index
    %c0_27 = arith.constant 0 : index
    %22 = vector.load %arg11[%c0_26, %c0_27] : memref<10x1xf32, #tpu.memory_space<vmem>>, vector<10x1xf32>
    %23 = vector.broadcast %22 : vector<10x1xf32> to vector<10x256xf32>
    %24 = arith.addf %21, %23 : vector<10x256xf32>
    %cst_28 = arith.constant 0.000000e+00 : f32
    %25 = vector.broadcast %cst_28 : f32 to vector<10x256xf32>
    %26 = arith.maximumf %24, %25 : vector<10x256xf32>
    %c0_29 = arith.constant 0 : index
    %c0_30 = arith.constant 0 : index
    %c0_31 = arith.constant 0 : index
    %27 = vector.load %arg6[%c0_29, %c0_30, %c0_31] : memref<1x10x256xf32, #tpu.memory_space<vmem>>, vector<1x10x256xf32>
    %28 = vector.shape_cast %27 : vector<1x10x256xf32> to vector<10x256xf32>
    %29 = arith.addf %26, %28 : vector<10x256xf32>
    %c0_32 = arith.constant 0 : index
    %c0_33 = arith.constant 0 : index
    %c0_34 = arith.constant 0 : index
    %30 = vector.load %arg7[%c0_32, %c0_33, %c0_34] : memref<1x10x256xf32, #tpu.memory_space<vmem>>, vector<1x10x256xf32>
    %31 = vector.shape_cast %30 : vector<1x10x256xf32> to vector<10x256xf32>
    %32 = arith.addf %29, %31 : vector<10x256xf32>
    %c0_35 = arith.constant 0 : index
    %c0_36 = arith.constant 0 : index
    %c0_37 = arith.constant 0 : index
    %33 = vector.load %arg12[%c0_35, %c0_36, %c0_37] : memref<1x10x256xf32, #tpu.memory_space<vmem>>, vector<1x10x256xf32>
    %34 = vector.shape_cast %33 : vector<1x10x256xf32> to vector<10x256xf32>
    %35 = vector.shape_cast %32 : vector<10x256xf32> to vector<1x10x256xf32>
    tpu.vector_store %arg12[%c0_35, %c0_36, %c0_37], %35 {strides = array<i32>} : memref<1x10x256xf32, #tpu.memory_space<vmem>>, vector<1x10x256xf32>,
    return
  }
  func.func @transform_0(%arg0: i32, %arg1: i32) -> (i32, i32, i32) {
    %c0_i32 = arith.constant 0 : i32
    %c0_i32_0 = arith.constant 0 : i32
    return %arg0, %c0_i32, %arg1 : i32, i32, i32
  }
  func.func @transform_1(%arg0: i32, %arg1: i32) -> (i32, i32, i32) {
    %c0_i32 = arith.constant 0 : i32
    %c0_i32_0 = arith.constant 0 : i32
    return %arg0, %c0_i32, %arg1 : i32, i32, i32
  }
  func.func @transform_2(%arg0: i32, %arg1: i32) -> (i32, i32, i32) {
    %c0_i32 = arith.constant 0 : i32
    %c0_i32_0 = arith.constant 0 : i32
    return %arg0, %c0_i32, %arg1 : i32, i32, i32
  }
  func.func @transform_3(%arg0: i32, %arg1: i32) -> (i32, i32, i32) {
    %c0_i32 = arith.constant 0 : i32
    %c0_i32_0 = arith.constant 0 : i32
    return %arg0, %c0_i32, %arg1 : i32, i32, i32
  }
  func.func @transform_4(%arg0: i32, %arg1: i32) -> (i32, i32, i32) {
    %c0_i32 = arith.constant 0 : i32
    %c0_i32_0 = arith.constant 0 : i32
    return %arg0, %c0_i32, %arg1 : i32, i32, i32
  }
  func.func @transform_5(%arg0: i32, %arg1: i32) -> (i32, i32, i32) {
    %c0_i32 = arith.constant 0 : i32
    %c0_i32_0 = arith.constant 0 : i32
    return %arg0, %c0_i32, %arg1 : i32, i32, i32
  }
  func.func @transform_6(%arg0: i32, %arg1: i32) -> (i32, i32) {
    %c0_i32 = arith.constant 0 : i32
    %c0_i32_0 = arith.constant 0 : i32
    %c0_i32_1 = arith.constant 0 : i32
    return %c0_i32, %c0_i32_0 : i32, i32
  }
  func.func @transform_7(%arg0: i32, %arg1: i32) -> (i32, i32) {
    %c0_i32 = arith.constant 0 : i32
    %c0_i32_0 = arith.constant 0 : i32
    %c0_i32_1 = arith.constant 0 : i32
    return %c0_i32, %c0_i32_0 : i32, i32
  }
  func.func @transform_8(%arg0: i32, %arg1: i32) -> (i32, i32) {
    %c0_i32 = arith.constant 0 : i32
    %c0_i32_0 = arith.constant 0 : i32
    %c0_i32_1 = arith.constant 0 : i32
    return %c0_i32, %c0_i32_0 : i32, i32
  }
  func.func @transform_9(%arg0: i32, %arg1: i32) -> (i32, i32) {
    %c0_i32 = arith.constant 0 : i32
    %c0_i32_0 = arith.constant 0 : i32
    %c0_i32_1 = arith.constant 0 : i32
    return %c0_i32, %c0_i32_0 : i32, i32
  }
  func.func @transform_10(%arg0: i32, %arg1: i32) -> (i32, i32, i32) {
    %c0_i32 = arith.constant 0 : i32
    %c0_i32_0 = arith.constant 0 : i32
    return %arg0, %c0_i32, %arg1 : i32, i32, i32
  }
}

</mosaic_0001>

<llo_original>
// kernel: tpu_custom_call.1
$region0: #{tpu_custom_call.1}
  #allocation0 [shape = 'u32[]', space=smem, size = 0x4, offset = 0x4, fixed_abs, tag = 'smem constant byte address 0x4 - core index']
  #allocation1 [shape = 'u32[144,128]{1,0:T(1,128)}', space=vmem, size = 0x12000, scoped, tag = 'internal scratch']
  #allocation2 [shape = 'f32[40,256]{1,0:T(8,128)}', space=vmem, size = 0xa000, scoped, tag = 'scratch operand']
  %s0 = inlined_call_operand.vmem [shape: f32[2,10,256], index: 0, kind: input, shape index: {}]
  %s1 = inlined_call_operand.vmem [shape: f32[2,10,256], index: 1, kind: input, shape index: {}]
  %s2 = inlined_call_operand.vmem [shape: f32[2,10,256], index: 2, kind: input, shape index: {}]
  %s3 = inlined_call_operand.vmem [shape: f32[2,10,256], index: 3, kind: input, shape index: {}]
  %s4 = inlined_call_operand.vmem [shape: f32[2,10,256], index: 4, kind: input, shape index: {}]
  %s5 = inlined_call_operand.vmem [shape: f32[2,10,256], index: 5, kind: input, shape index: {}]
  %s6 = inlined_call_operand.vmem [shape: f32[20,40], index: 6, kind: input, shape index: {}]
  %s7 = inlined_call_operand.vmem [shape: f32[20,1], index: 7, kind: input, shape index: {}]
  %s8 = inlined_call_operand.vmem [shape: f32[10,20], index: 8, kind: input, shape index: {}]
  %s9 = inlined_call_operand.vmem [shape: f32[10,1], index: 9, kind: input, shape index: {}]
  %s10 = inlined_call_operand.vmem [shape: f32[2,10,256], index: 10, kind: output, shape index: {}]
  %s11 = sld [smem:[#allocation0]]
  $region73: #{tpu_custom_call.1} parent=0
    _
  %s13 = ssub.s32 1, %s11
  %s14 = scalar_select 0, %s13, %s11
  loop: start=0, step=1, limit=4
  $region2: #{tpu_custom_call.1} parent=0 // loop_pre_header
    _
  $region3: #{tpu_custom_call.1} parent=0 // loop_header
    %s16 = sphi 0, %s20
    %p17 = scmp.ge.s32.totalorder %s16, 4
    %s23 = sphi 0, %s35
    %s24 = sphi 0, %s31
    %s25 = sphi 0, %s23
    %s26 = sphi 0, %s24
    %s27 = sphi 0, %s25
    %s28 = sphi 0, %s26
    %s40 = sphi 0, %s42
    %s43 = sphi 0, %s40
    %s44 = sphi 0, %s43
    %s60 = sphi 0, %s44
    %s68 = sphi 0, %s70
    %s71 = sphi 0, %s68
    %s72 = sphi 0, %s71
    %s88 = sphi 0, %s72
    %s96 = sphi 0, %s98
    %s99 = sphi 0, %s96
    %s100 = sphi 0, %s99
    %s116 = sphi 0, %s100
    %s124 = sphi 0, %s126
    %s127 = sphi 0, %s124
    %s128 = sphi 0, %s127
    %s144 = sphi 0, %s128
    %s152 = sphi 0, %s154
    %s155 = sphi 0, %s152
    %s156 = sphi 0, %s155
    %s172 = sphi 0, %s156
    %s180 = sphi 0, %s182
    %s183 = sphi 0, %s180
    %s184 = sphi 0, %s183
    %s200 = sphi 0, %s184
    %s204 = sphi 0, %s204
    %s206 = sphi 0, %s204
    %s207 = sphi 0, %s206
    %s221 = sphi 0, %s207
    %s225 = sphi 0, %s225
    %s227 = sphi 0, %s225
    %s228 = sphi 0, %s227
    %s242 = sphi 0, %s228
    %s246 = sphi 0, %s246
    %s248 = sphi 0, %s246
    %s249 = sphi 0, %s248
    %s263 = sphi 0, %s249
    %s267 = sphi 0, %s267
    %s269 = sphi 0, %s267
    %s270 = sphi 0, %s269
    %s284 = sphi 0, %s270
    %s292 = sphi 0, %s294
    %s295 = sphi 0, %s292
    %s296 = sphi 0, %s295
    %s312 = sphi 0, %s296
  $region4: #{tpu_custom_call.1} parent=0 // loop_header_branch
    %19 = sbr.rel (%p17) target = $region8
  $region5: #{tpu_custom_call.1} parent=0 // loop_body
    %s21 = ssub.s32 %s16, 1
    %s22 = ssub.s32 %s16, 2
    %s29 = sadd.s32 1, %s24
    %p30 = scmp.ge.s32.totalorder %s29, 1
    %s31 = scalar_select %p30, 0, %s29
    %s32 = sadd.s32 1, %s23
    %s33 = scalar_select %p30, %s32, %s23
    %p34 = scmp.ge.s32.totalorder %s33, 2
    %s35 = scalar_select %p34, 0, %s33
    %s36 = ssub.s32 %s23, %s35
    %s37 = ssub.s32 %s24, %s31
    %s38 = sor.u32 %s36, %s37
    %p39 = scmp.eq.s32.totalorder %s38, 0
    %s41 = sadd.s32 %s40, 1
    %s42 = scalar_select %p39, %s40, %s41
    %p45 = pneg %p39
    %p46 = scmp.eq.s32.totalorder %s16, 1
    %p47 = por %p45, %p46
    %p48 = scmp.ne.s32.totalorder %s40, %s43
    %p49 = scmp.eq.s32.totalorder %s16, 0
    %p50 = por %p48, %p49
    %p51 = scmp.ne.s32.totalorder %s40, %s43
    %p52 = scmp.eq.s32.totalorder %s21, 1
    %p53 = por %p51, %p52
    %p54 = scmp.ne.s32.totalorder %s43, %s44
    %p55 = scmp.eq.s32.totalorder %s21, 0
    %p56 = por %p54, %p55
    %p57 = scmp.ne.s32.totalorder %s43, %s44
    %p58 = scmp.eq.s32.totalorder %s22, 1
    %p59 = por %p57, %p58
    %p61 = scmp.ne.s32.totalorder %s44, %s60
    %p62 = scmp.eq.s32.totalorder %s22, 0
    %p63 = por %p61, %p62
    %s64 = ssub.s32 %s23, %s35
    %s65 = ssub.s32 %s24, %s31
    %s66 = sor.u32 %s64, %s65
    %p67 = scmp.eq.s32.totalorder %s66, 0
    %s69 = sadd.s32 %s68, 1
    %s70 = scalar_select %p67, %s68, %s69
    %p73 = pneg %p67
    %p74 = scmp.eq.s32.totalorder %s16, 1
    %p75 = por %p73, %p74
    %p76 = scmp.ne.s32.totalorder %s68, %s71
    %p77 = scmp.eq.s32.totalorder %s16, 0
    %p78 = por %p76, %p77
    %p79 = scmp.ne.s32.totalorder %s68, %s71
    %p80 = scmp.eq.s32.totalorder %s21, 1
    %p81 = por %p79, %p80
    %p82 = scmp.ne.s32.totalorder %s71, %s72
    %p83 = scmp.eq.s32.totalorder %s21, 0
    %p84 = por %p82, %p83
    %p85 = scmp.ne.s32.totalorder %s71, %s72
    %p86 = scmp.eq.s32.totalorder %s22, 1
    %p87 = por %p85, %p86
    %p89 = scmp.ne.s32.totalorder %s72, %s88
    %p90 = scmp.eq.s32.totalorder %s22, 0
    %p91 = por %p89, %p90
    %s92 = ssub.s32 %s23, %s35
    %s93 = ssub.s32 %s24, %s31
    %s94 = sor.u32 %s92, %s93
    %p95 = scmp.eq.s32.totalorder %s94, 0
    %s97 = sadd.s32 %s96, 1
    %s98 = scalar_select %p95, %s96, %s97
    %p101 = pneg %p95
    %p102 = scmp.eq.s32.totalorder %s16, 1
    %p103 = por %p101, %p102
    %p104 = scmp.ne.s32.totalorder %s96, %s99
    %p105 = scmp.eq.s32.totalorder %s16, 0
    %p106 = por %p104, %p105
    %p107 = scmp.ne.s32.totalorder %s96, %s99
    %p108 = scmp.eq.s32.totalorder %s21, 1
    %p109 = por %p107, %p108
    %p110 = scmp.ne.s32.totalorder %s99, %s100
    %p111 = scmp.eq.s32.totalorder %s21, 0
    %p112 = por %p110, %p111
    %p113 = scmp.ne.s32.totalorder %s99, %s100
    %p114 = scmp.eq.s32.totalorder %s22, 1
    %p115 = por %p113, %p114
    %p117 = scmp.ne.s32.totalorder %s100, %s116
    %p118 = scmp.eq.s32.totalorder %s22, 0
    %p119 = por %p117, %p118
    %s120 = ssub.s32 %s23, %s35
    %s121 = ssub.s32 %s24, %s31
    %s122 = sor.u32 %s120, %s121
    %p123 = scmp.eq.s32.totalorder %s122, 0
    %s125 = sadd.s32 %s124, 1
    %s126 = scalar_select %p123, %s124, %s125
    %p129 = pneg %p123
    %p130 = scmp.eq.s32.totalorder %s16, 1
    %p131 = por %p129, %p130
    %p132 = scmp.ne.s32.totalorder %s124, %s127
    %p133 = scmp.eq.s32.totalorder %s16, 0
    %p134 = por %p132, %p133
    %p135 = scmp.ne.s32.totalorder %s124, %s127
    %p136 = scmp.eq.s32.totalorder %s21, 1
    %p137 = por %p135, %p136
    %p138 = scmp.ne.s32.totalorder %s127, %s128
    %p139 = scmp.eq.s32.totalorder %s21, 0
    %p140 = por %p138, %p139
    %p141 = scmp.ne.s32.totalorder %s127, %s128
    %p142 = scmp.eq.s32.totalorder %s22, 1
    %p143 = por %p141, %p142
    %p145 = scmp.ne.s32.totalorder %s128, %s144
    %p146 = scmp.eq.s32.totalorder %s22, 0
    %p147 = por %p145, %p146
    %s148 = ssub.s32 %s23, %s35
    %s149 = ssub.s32 %s24, %s31
    %s150 = sor.u32 %s148, %s149
    %p151 = scmp.eq.s32.totalorder %s150, 0
    %s153 = sadd.s32 %s152, 1
    %s154 = scalar_select %p151, %s152, %s153
    %p157 = pneg %p151
    %p158 = scmp.eq.s32.totalorder %s16, 1
    %p159 = por %p157, %p158
    %p160 = scmp.ne.s32.totalorder %s152, %s155
    %p161 = scmp.eq.s32.totalorder %s16, 0
    %p162 = por %p160, %p161
    %p163 = scmp.ne.s32.totalorder %s152, %s155
    %p164 = scmp.eq.s32.totalorder %s21, 1
    %p165 = por %p163, %p164
    %p166 = scmp.ne.s32.totalorder %s155, %s156
    %p167 = scmp.eq.s32.totalorder %s21, 0
    %p168 = por %p166, %p167
    %p169 = scmp.ne.s32.totalorder %s155, %s156
    %p170 = scmp.eq.s32.totalorder %s22, 1
    %p171 = por %p169, %p170
    %p173 = scmp.ne.s32.totalorder %s156, %s172
    %p174 = scmp.eq.s32.totalorder %s22, 0
    %p175 = por %p173, %p174
    %s176 = ssub.s32 %s23, %s35
    %s177 = ssub.s32 %s24, %s31
    %s178 = sor.u32 %s176, %s177
    %p179 = scmp.eq.s32.totalorder %s178, 0
    %s181 = sadd.s32 %s180, 1
    %s182 = scalar_select %p179, %s180, %s181
    %p185 = pneg %p179
    %p186 = scmp.eq.s32.totalorder %s16, 1
    %p187 = por %p185, %p186
    %p188 = scmp.ne.s32.totalorder %s180, %s183
    %p189 = scmp.eq.s32.totalorder %s16, 0
    %p190 = por %p188, %p189
    %p191 = scmp.ne.s32.totalorder %s180, %s183
    %p192 = scmp.eq.s32.totalorder %s21, 1
    %p193 = por %p191, %p192
    %p194 = scmp.ne.s32.totalorder %s183, %s184
    %p195 = scmp.eq.s32.totalorder %s21, 0
    %p196 = por %p194, %p195
    %p197 = scmp.ne.s32.totalorder %s183, %s184
    %p198 = scmp.eq.s32.totalorder %s22, 1
    %p199 = por %p197, %p198
    %p201 = scmp.ne.s32.totalorder %s184, %s200
    %p202 = scmp.eq.s32.totalorder %s22, 0
    %p203 = por %p201, %p202
    %s205 = sadd.s32 %s204, 1
    %p208 = scmp.eq.s32.totalorder %s16, 1
    %p209 = scmp.ne.s32.totalorder %s204, %s206
    %p210 = scmp.eq.s32.totalorder %s16, 0
    %p211 = por %p209, %p210
    %p212 = scmp.ne.s32.totalorder %s204, %s206
    %p213 = scmp.eq.s32.totalorder %s21, 1
    %p214 = por %p212, %p213
    %p215 = scmp.ne.s32.totalorder %s206, %s207
    %p216 = scmp.eq.s32.totalorder %s21, 0
    %p217 = por %p215, %p216
    %p218 = scmp.ne.s32.totalorder %s206, %s207
    %p219 = scmp.eq.s32.totalorder %s22, 1
    %p220 = por %p218, %p219
    %p222 = scmp.ne.s32.totalorder %s207, %s221
    %p223 = scmp.eq.s32.totalorder %s22, 0
    %p224 = por %p222, %p223
    %s226 = sadd.s32 %s225, 1
    %p229 = scmp.eq.s32.totalorder %s16, 1
    %p230 = scmp.ne.s32.totalorder %s225, %s227
    %p231 = scmp.eq.s32.totalorder %s16, 0
    %p232 = por %p230, %p231
    %p233 = scmp.ne.s32.totalorder %s225, %s227
    %p234 = scmp.eq.s32.totalorder %s21, 1
    %p235 = por %p233, %p234
    %p236 = scmp.ne.s32.totalorder %s227, %s228
    %p237 = scmp.eq.s32.totalorder %s21, 0
    %p238 = por %p236, %p237
    %p239 = scmp.ne.s32.totalorder %s227, %s228
    %p240 = scmp.eq.s32.totalorder %s22, 1
    %p241 = por %p239, %p240
    %p243 = scmp.ne.s32.totalorder %s228, %s242
    %p244 = scmp.eq.s32.totalorder %s22, 0
    %p245 = por %p243, %p244
    %s247 = sadd.s32 %s246, 1
    %p250 = scmp.eq.s32.totalorder %s16, 1
    %p251 = scmp.ne.s32.totalorder %s246, %s248
    %p252 = scmp.eq.s32.totalorder %s16, 0
    %p253 = por %p251, %p252
    %p254 = scmp.ne.s32.totalorder %s246, %s248
    %p255 = scmp.eq.s32.totalorder %s21, 1
    %p256 = por %p254, %p255
    %p257 = scmp.ne.s32.totalorder %s248, %s249
    %p258 = scmp.eq.s32.totalorder %s21, 0
    %p259 = por %p257, %p258
    %p260 = scmp.ne.s32.totalorder %s248, %s249
    %p261 = scmp.eq.s32.totalorder %s22, 1
    %p262 = por %p260, %p261
    %p264 = scmp.ne.s32.totalorder %s249, %s263
    %p265 = scmp.eq.s32.totalorder %s22, 0
    %p266 = por %p264, %p265
    %s268 = sadd.s32 %s267, 1
    %p271 = scmp.eq.s32.totalorder %s16, 1
    %p272 = scmp.ne.s32.totalorder %s267, %s269
    %p273 = scmp.eq.s32.totalorder %s16, 0
    %p274 = por %p272, %p273
    %p275 = scmp.ne.s32.totalorder %s267, %s269
    %p276 = scmp.eq.s32.totalorder %s21, 1
    %p277 = por %p275, %p276
    %p278 = scmp.ne.s32.totalorder %s269, %s270
    %p279 = scmp.eq.s32.totalorder %s21, 0
    %p280 = por %p278, %p279
    %p281 = scmp.ne.s32.totalorder %s269, %s270
    %p282 = scmp.eq.s32.totalorder %s22, 1
    %p283 = por %p281, %p282
    %p285 = scmp.ne.s32.totalorder %s270, %s284
    %p286 = scmp.eq.s32.totalorder %s22, 0
    %p287 = por %p285, %p286
    %s288 = ssub.s32 %s23, %s35
    %s289 = ssub.s32 %s24, %s31
    %s290 = sor.u32 %s288, %s289
    %p291 = scmp.eq.s32.totalorder %s290, 0
    %s293 = sadd.s32 %s292, 1
    %s294 = scalar_select %p291, %s292, %s293
    %p297 = pneg %p291
    %p298 = scmp.eq.s32.totalorder %s16, 1
    %p299 = por %p297, %p298
    %p300 = scmp.ne.s32.totalorder %s292, %s295
    %p301 = scmp.eq.s32.totalorder %s16, 0
    %p302 = por %p300, %p301
    %p303 = scmp.ne.s32.totalorder %s292, %s295
    %p304 = scmp.eq.s32.totalorder %s21, 1
    %p305 = por %p303, %p304
    %p306 = scmp.ne.s32.totalorder %s295, %s296
    %p307 = scmp.eq.s32.totalorder %s21, 0
    %p308 = por %p306, %p307
    %p309 = scmp.ne.s32.totalorder %s295, %s296
    %p310 = scmp.eq.s32.totalorder %s22, 1
    %p311 = por %p309, %p310
    %p313 = scmp.ne.s32.totalorder %s296, %s312
    %p314 = scmp.eq.s32.totalorder %s22, 0
    %p315 = por %p313, %p314
    %p316 = scmp.le.s32.totalorder 1, %s16
    %p317 = scmp.lt.s32.totalorder %s16, 3
    %p318 = pnand %p316, %p317
    %p319 = pneg %p318
    // Predicated region
    $region9: #{tpu_custom_call.1} parent=5 // pred_check
      _
    $region10: #{tpu_custom_call.1} parent=5 // pred_check_branch
      %321 = sbr.rel (%p318) target = $region12
    $region11: #{tpu_custom_call.1} parent=5 // pred_region
      %s322 = ssub.s32 %s16, 1
      // Predicated region
      $region13: #{tpu_custom_call.1} parent=11 // pred_check
        %p323 = pneg %p217
      $region14: #{tpu_custom_call.1} parent=11 // pred_check_branch
        %325 = sbr.rel (%p323) target = $region16
      $region15: #{tpu_custom_call.1} parent=11 // pred_region
        _
      $region16: #{tpu_custom_call.1} parent=11 // pred_fallthru
        _
      // Predicated region
      $region17: #{tpu_custom_call.1} parent=11 // pred_check
        %p326 = pneg %p238
      $region18: #{tpu_custom_call.1} parent=11 // pred_check_branch
        %328 = sbr.rel (%p326) target = $region20
      $region19: #{tpu_custom_call.1} parent=11 // pred_region
        _
      $region20: #{tpu_custom_call.1} parent=11 // pred_fallthru
        _
      // Predicated region
      $region21: #{tpu_custom_call.1} parent=11 // pred_check
        %p329 = pneg %p259
      $region22: #{tpu_custom_call.1} parent=11 // pred_check_branch
        %331 = sbr.rel (%p329) target = $region24
      $region23: #{tpu_custom_call.1} parent=11 // pred_region
        _
      $region24: #{tpu_custom_call.1} parent=11 // pred_fallthru
        _
      // Predicated region
      $region25: #{tpu_custom_call.1} parent=11 // pred_check
        %p332 = pneg %p280
      $region26: #{tpu_custom_call.1} parent=11 // pred_check_branch
        %334 = sbr.rel (%p332) target = $region28
      $region27: #{tpu_custom_call.1} parent=11 // pred_region
        _
      $region28: #{tpu_custom_call.1} parent=11 // pred_fallthru
        _
    $region12: #{tpu_custom_call.1} parent=5 // pred_fallthru
      _
    %p335 = scmp.lt.s32.totalorder %s16, 2
    // Predicated region
    $region29: #{tpu_custom_call.1} parent=5 // pred_check
      %p336 = pneg %p335
    $region30: #{tpu_custom_call.1} parent=5 // pred_check_branch
      %338 = sbr.rel (%p336) target = $region32
    $region31: #{tpu_custom_call.1} parent=5 // pred_region
      // Predicated region
      $region33: #{tpu_custom_call.1} parent=31 // pred_check
        %p339 = pneg %p50
      $region34: #{tpu_custom_call.1} parent=31 // pred_check_branch
        %341 = sbr.rel (%p339) target = $region36
      $region35: #{tpu_custom_call.1} parent=31 // pred_region
        %s342 = smul.u32 2, %s24
        %p343 = scmp.lt.s32.totalorder %s23, 1
        %s344 = scalar_select %p343, %s23, 1
        %p345 = scmp.lt.s32.totalorder %s342, 1
        %s346 = scalar_select %p345, %s342, 1
        %s347 = smul.addr %s344, 4
        %s348 = sadd.s32 %s346, %s347
        %s349 = smul.addr %s348, 8
        %s350 = scalar_lea.vmem %s0, %s349
        %s351 = smul.u32 2, %s24
      $region36: #{tpu_custom_call.1} parent=31 // pred_fallthru
        _
      // Predicated region
      $region37: #{tpu_custom_call.1} parent=31 // pred_check
        %p352 = pneg %p78
      $region38: #{tpu_custom_call.1} parent=31 // pred_check_branch
        %354 = sbr.rel (%p352) target = $region40
      $region39: #{tpu_custom_call.1} parent=31 // pred_region
        %s355 = smul.u32 2, %s24
        %p356 = scmp.lt.s32.totalorder %s23, 1
        %s357 = scalar_select %p356, %s23, 1
        %p358 = scmp.lt.s32.totalorder %s355, 1
        %s359 = scalar_select %p358, %s355, 1
        %s360 = smul.addr %s357, 4
        %s361 = sadd.s32 %s359, %s360
        %s362 = smul.addr %s361, 8
        %s363 = scalar_lea.vmem %s1, %s362
        %s364 = smul.u32 2, %s24
      $region40: #{tpu_custom_call.1} parent=31 // pred_fallthru
        _
      // Predicated region
      $region41: #{tpu_custom_call.1} parent=31 // pred_check
        %p365 = pneg %p106
      $region42: #{tpu_custom_call.1} parent=31 // pred_check_branch
        %367 = sbr.rel (%p365) target = $region44
      $region43: #{tpu_custom_call.1} parent=31 // pred_region
        %s368 = smul.u32 2, %s24
        %p369 = scmp.lt.s32.totalorder %s23, 1
        %s370 = scalar_select %p369, %s23, 1
        %p371 = scmp.lt.s32.totalorder %s368, 1
        %s372 = scalar_select %p371, %s368, 1
        %s373 = smul.addr %s370, 4
        %s374 = sadd.s32 %s372, %s373
        %s375 = smul.addr %s374, 8
        %s376 = scalar_lea.vmem %s2, %s375
        %s377 = smul.u32 2, %s24
      $region44: #{tpu_custom_call.1} parent=31 // pred_fallthru
        _
      // Predicated region
      $region45: #{tpu_custom_call.1} parent=31 // pred_check
        %p378 = pneg %p134
      $region46: #{tpu_custom_call.1} parent=31 // pred_check_branch
        %380 = sbr.rel (%p378) target = $region48
      $region47: #{tpu_custom_call.1} parent=31 // pred_region
        %s381 = smul.u32 2, %s24
        %p382 = scmp.lt.s32.totalorder %s23, 1
        %s383 = scalar_select %p382, %s23, 1
        %p384 = scmp.lt.s32.totalorder %s381, 1
        %s385 = scalar_select %p384, %s381, 1
        %s386 = smul.addr %s383, 4
        %s387 = sadd.s32 %s385, %s386
        %s388 = smul.addr %s387, 8
        %s389 = scalar_lea.vmem %s3, %s388
        %s390 = smul.u32 2, %s24
      $region48: #{tpu_custom_call.1} parent=31 // pred_fallthru
        _
      // Predicated region
      $region49: #{tpu_custom_call.1} parent=31 // pred_check
        %p391 = pneg %p162
      $region50: #{tpu_custom_call.1} parent=31 // pred_check_branch
        %393 = sbr.rel (%p391) target = $region52
      $region51: #{tpu_custom_call.1} parent=31 // pred_region
        %s394 = smul.u32 2, %s24
        %p395 = scmp.lt.s32.totalorder %s23, 1
        %s396 = scalar_select %p395, %s23, 1
        %p397 = scmp.lt.s32.totalorder %s394, 1
        %s398 = scalar_select %p397, %s394, 1
        %s399 = smul.addr %s396, 4
        %s400 = sadd.s32 %s398, %s399
        %s401 = smul.addr %s400, 8
        %s402 = scalar_lea.vmem %s4, %s401
        %s403 = smul.u32 2, %s24
      $region52: #{tpu_custom_call.1} parent=31 // pred_fallthru
        _
      // Predicated region
      $region53: #{tpu_custom_call.1} parent=31 // pred_check
        %p404 = pneg %p190
      $region54: #{tpu_custom_call.1} parent=31 // pred_check_branch
        %406 = sbr.rel (%p404) target = $region56
      $region55: #{tpu_custom_call.1} parent=31 // pred_region
        %s407 = smul.u32 2, %s24
        %p408 = scmp.lt.s32.totalorder %s23, 1
        %s409 = scalar_select %p408, %s23, 1
        %p410 = scmp.lt.s32.totalorder %s407, 1
        %s411 = scalar_select %p410, %s407, 1
        %s412 = smul.addr %s409, 4
        %s413 = sadd.s32 %s411, %s412
        %s414 = smul.addr %s413, 8
        %s415 = scalar_lea.vmem %s5, %s414
        %s416 = smul.u32 2, %s24
      $region56: #{tpu_custom_call.1} parent=31 // pred_fallthru
        _
    $region32: #{tpu_custom_call.1} parent=5 // pred_fallthru
      _
    %p417 = scmp.le.s32.totalorder 1, %s16
    %p418 = scmp.lt.s32.totalorder %s16, 3
    %p419 = pnand %p417, %p418
    %p420 = pneg %p419
    // Predicated region
    $region57: #{tpu_custom_call.1} parent=5 // pred_check
      _
    $region58: #{tpu_custom_call.1} parent=5 // pred_check_branch
      %422 = sbr.rel (%p419) target = $region60
    $region59: #{tpu_custom_call.1} parent=5 // pred_region
      %s423 = ssub.s32 %s16, 1
      %s424 = smul.u32 2, %s26
      %p425 = scmp.lt.s32.totalorder %s25, 1
      %s426 = scalar_select %p425, %s25, 1
      %p427 = scmp.lt.s32.totalorder %s424, 1
      %s428 = scalar_select %p427, %s424, 1
      %s429 = smul.addr %s426, 4
      %s430 = sadd.s32 %s428, %s429
      %s431 = smul.addr %s430, 8
      %s432 = scalar_lea.vmem %s0, %s431
      %p433 = pneg %p56
      %p434 = pneg %p53
      %s435 = smul.u32 2, %s26
      %p436 = scmp.lt.s32.totalorder %s25, 1
      %s437 = scalar_select %p436, %s25, 1
      %p438 = scmp.lt.s32.totalorder %s435, 1
      %s439 = scalar_select %p438, %s435, 1
      %s440 = smul.addr %s437, 4
      %s441 = sadd.s32 %s439, %s440
      %s442 = smul.addr %s441, 8
      %s443 = scalar_lea.vmem %s1, %s442
      %p444 = pneg %p84
      %p445 = pneg %p81
      %s446 = smul.u32 2, %s26
      %p447 = scmp.lt.s32.totalorder %s25, 1
      %s448 = scalar_select %p447, %s25, 1
      %p449 = scmp.lt.s32.totalorder %s446, 1
      %s450 = scalar_select %p449, %s446, 1
      %s451 = smul.addr %s448, 4
      %s452 = sadd.s32 %s450, %s451
      %s453 = smul.addr %s452, 8
      %s454 = scalar_lea.vmem %s2, %s453
      %p455 = pneg %p112
      %p456 = pneg %p109
      %s457 = smul.u32 2, %s26
      %p458 = scmp.lt.s32.totalorder %s25, 1
      %s459 = scalar_select %p458, %s25, 1
      %p460 = scmp.lt.s32.totalorder %s457, 1
      %s461 = scalar_select %p460, %s457, 1
      %s462 = smul.addr %s459, 4
      %s463 = sadd.s32 %s461, %s462
      %s464 = smul.addr %s463, 8
      %s465 = scalar_lea.vmem %s3, %s464
      %p466 = pneg %p140
      %p467 = pneg %p137
      %s468 = smul.u32 2, %s26
      %p469 = scmp.lt.s32.totalorder %s25, 1
      %s470 = scalar_select %p469, %s25, 1
      %p471 = scmp.lt.s32.totalorder %s468, 1
      %s472 = scalar_select %p471, %s468, 1
      %s473 = smul.addr %s470, 4
      %s474 = sadd.s32 %s472, %s473
      %s475 = smul.addr %s474, 8
      %s476 = scalar_lea.vmem %s4, %s475
      %p477 = pneg %p168
      %p478 = pneg %p165
      %s479 = smul.u32 2, %s26
      %p480 = scmp.lt.s32.totalorder %s25, 1
      %s481 = scalar_select %p480, %s25, 1
      %p482 = scmp.lt.s32.totalorder %s479, 1
      %s483 = scalar_select %p482, %s479, 1
      %s484 = smul.addr %s481, 4
      %s485 = sadd.s32 %s483, %s484
      %s486 = smul.addr %s485, 8
      %s487 = scalar_lea.vmem %s5, %s486
      %p488 = pneg %p196
      %p489 = pneg %p193
      %p490 = pneg %p217
      %p491 = pneg %p214
      %p492 = pneg %p238
      %p493 = pneg %p235
      %p494 = pneg %p259
      %p495 = pneg %p256
      %p496 = pneg %p280
      %p497 = pneg %p277
      %p498 = pneg %p308
      %p499 = pneg %p305
      %s500 = smul.u32 2, %s26
      %p501 = scmp.lt.s32.totalorder %s25, 1
      %s502 = scalar_select %p501, %s25, 1
      %p503 = scmp.lt.s32.totalorder %s500, 1
      %s504 = scalar_select %p503, %s500, 1
      %s505 = smul.addr %s502, 4
      %s506 = sadd.s32 %s504, %s505
      %s507 = smul.addr %s506, 8
      %s508 = scalar_lea.vmem %s10, %s507
      %s509 = smul.u32 2, %s26
      %p510 = scmp.lt.s32.totalorder %s25, 1
      %s511 = scalar_select %p510, %s25, 1
      %p512 = scmp.lt.s32.totalorder %s509, 1
      %s513 = scalar_select %p512, %s509, 1
      %s514 = smul.addr %s511, 4
      %s515 = sadd.s32 %s513, %s514
      %s516 = smul.addr %s515, 8
      %s517 = scalar_lea.vmem %s0, %s516
      %s518 = smul.u32 2, %s26
      %s519 = smul.u32 2, %s26
      %p520 = scmp.lt.s32.totalorder %s25, 1
      %s521 = scalar_select %p520, %s25, 1
      %p522 = scmp.lt.s32.totalorder %s519, 1
      %s523 = scalar_select %p522, %s519, 1
      %s524 = smul.addr %s521, 4
      %s525 = sadd.s32 %s523, %s524
      %s526 = smul.addr %s525, 8
      %s527 = scalar_lea.vmem %s1, %s526
      %s528 = smul.u32 2, %s26
      %s529 = smul.u32 2, %s26
      %p530 = scmp.lt.s32.totalorder %s25, 1
      %s531 = scalar_select %p530, %s25, 1
      %p532 = scmp.lt.s32.totalorder %s529, 1
      %s533 = scalar_select %p532, %s529, 1
      %s534 = smul.addr %s531, 4
      %s535 = sadd.s32 %s533, %s534
      %s536 = smul.addr %s535, 8
      %s537 = scalar_lea.vmem %s2, %s536
      %s538 = smul.u32 2, %s26
      %s539 = smul.u32 2, %s26
      %p540 = scmp.lt.s32.totalorder %s25, 1
      %s541 = scalar_select %p540, %s25, 1
      %p542 = scmp.lt.s32.totalorder %s539, 1
      %s543 = scalar_select %p542, %s539, 1
      %s544 = smul.addr %s541, 4
      %s545 = sadd.s32 %s543, %s544
      %s546 = smul.addr %s545, 8
      %s547 = scalar_lea.vmem %s3, %s546
      %s548 = smul.u32 2, %s26
      %s549 = smul.u32 2, %s26
      %p550 = scmp.lt.s32.totalorder %s25, 1
      %s551 = scalar_select %p550, %s25, 1
      %p552 = scmp.lt.s32.totalorder %s549, 1
      %s553 = scalar_select %p552, %s549, 1
      %s554 = smul.addr %s551, 4
      %s555 = sadd.s32 %s553, %s554
      %s556 = smul.addr %s555, 8
      %s557 = scalar_lea.vmem %s4, %s556
      %s558 = smul.u32 2, %s26
      %s559 = smul.u32 2, %s26
      %p560 = scmp.lt.s32.totalorder %s25, 1
      %s561 = scalar_select %p560, %s25, 1
      %p562 = scmp.lt.s32.totalorder %s559, 1
      %s563 = scalar_select %p562, %s559, 1
      %s564 = smul.addr %s561, 4
      %s565 = sadd.s32 %s563, %s564
      %s566 = smul.addr %s565, 8
      %s567 = scalar_lea.vmem %s5, %s566
      %s568 = smul.u32 2, %s26
      %s569 = smul.u32 2, %s26
      %p570 = scmp.lt.s32.totalorder %s25, 1
      %s571 = scalar_select %p570, %s25, 1
      %p572 = scmp.lt.s32.totalorder %s569, 1
      %s573 = scalar_select %p572, %s569, 1
      %s574 = smul.addr %s571, 4
      %s575 = sadd.s32 %s573, %s574
      %s576 = smul.addr %s575, 8
      %s577 = scalar_lea.vmem %s10, %s576
      %s578 = smul.u32 2, %s26
      %v579 = vld [vmem:[%s517] sm:$0xff]
      %v580 = vld [vmem:[%s517 + $0x8] sm:$0xff]
      %v581 = vld [vmem:[%s517 + $0x10] sm:$0x3]
      %v582 = vld [vmem:[%s517 + $0x18] sm:$0x3]
      %583 = vst [vmem:[#allocation2] sm:$0xff] %v579
      %584 = vst [vmem:[#allocation2 + $0x8] sm:$0xff] %v580
      %585 = vst [vmem:[#allocation2 + $0x10] sm:$0x3] %v581
      %586 = vst [vmem:[#allocation2 + $0x18] sm:$0x3] %v582
      %v587 = vld [vmem:[%s527] sm:$0xff]
      %v588 = vld [vmem:[%s527 + $0x8] sm:$0xff]
      %v589 = vld [vmem:[%s527 + $0x10] sm:$0x3]
      %v590 = vld [vmem:[%s527 + $0x18] sm:$0x3]
      %vm595 = vcmask 1041408
      %v596 = vrot.slane %v587, 6
      %v597 = vrot.slane %v588, 6
      %v598 = vrot.slane %v589, 6
      %v599 = vsel %vm595, %v596, %v598
      %v600 = vrot.slane %v590, 6
      %v601 = vsel %vm595, %v597, %v600
      %606 = vst [vmem:[#allocation2 + $0x10] sm:$0xfc] %v596
      %607 = vst [vmem:[#allocation2 + $0x18] sm:$0xfc] %v597
      %608 = vst [vmem:[#allocation2 + $0x20] sm:$0xf] %v599
      %609 = vst [vmem:[#allocation2 + $0x28] sm:$0xf] %v601
      %v610 = vld [vmem:[%s537] sm:$0xff]
      %v611 = vld [vmem:[%s537 + $0x8] sm:$0xff]
      %v612 = vld [vmem:[%s537 + $0x10] sm:$0x3]
      %v613 = vld [vmem:[%s537 + $0x18] sm:$0x3]
      %vm618 = vcmask 1043456
      %v619 = vrot.slane %v610, 4
      %v620 = vrot.slane %v611, 4
      %v621 = vrot.slane %v612, 4
      %v622 = vsel %vm618, %v619, %v621
      %v623 = vrot.slane %v613, 4
      %v624 = vsel %vm618, %v620, %v623
      %629 = vst [vmem:[#allocation2 + $0x20] sm:$0xf0] %v619
      %630 = vst [vmem:[#allocation2 + $0x28] sm:$0xf0] %v620
      %631 = vst [vmem:[#allocation2 + $0x30] sm:$0x3f] %v622
      %632 = vst [vmem:[#allocation2 + $0x38] sm:$0x3f] %v624
      %v633 = vld [vmem:[%s547] sm:$0xff]
      %v634 = vld [vmem:[%s547 + $0x8] sm:$0xff]
      %v635 = vld [vmem:[%s547 + $0x10] sm:$0x3]
      %v636 = vld [vmem:[%s547 + $0x18] sm:$0x3]
      %vm641 = vcmask 1045504
      %v642 = vrot.slane %v633, 2
      %v643 = vrot.slane %v634, 2
      %v644 = vrot.slane %v635, 2
      %v645 = vsel %vm641, %v642, %v644
      %v646 = vrot.slane %v636, 2
      %v647 = vsel %vm641, %v643, %v646
      %652 = vst [vmem:[#allocation2 + $0x30] sm:$0xc0] %v642
      %653 = vst [vmem:[#allocation2 + $0x38] sm:$0xc0] %v643
      %654 = vst [vmem:[#allocation2 + $0x40] sm:$0xff] %v645
      %655 = vst [vmem:[#allocation2 + $0x48] sm:$0xff] %v647
      %v656 = vld [vmem:[%s6] sm:$0xff]
      %v657 = vld [vmem:[%s6 + $0x8] sm:$0xff]
      %v658 = vld [vmem:[%s6 + $0x10] sm:$0xf]
      %v659 = vld [vmem:[#allocation2] sm:$0xff]
      %v660 = vld [vmem:[#allocation2 + $0x8] sm:$0xff]
      %v661 = vld [vmem:[#allocation2 + $0x10] sm:$0xff]
      %v662 = vld [vmem:[#allocation2 + $0x18] sm:$0xff]
      %v663 = vld [vmem:[#allocation2 + $0x20] sm:$0xff]
      %v664 = vld [vmem:[#allocation2 + $0x28] sm:$0xff]
      %v665 = vld [vmem:[#allocation2 + $0x30] sm:$0xff]
      %v666 = vld [vmem:[#allocation2 + $0x38] sm:$0xff]
      %v667 = vld [vmem:[#allocation2 + $0x40] sm:$0xff]
      %v668 = vld [vmem:[#allocation2 + $0x48] sm:$0xff]
      %v669 = vld [vmem:[%s7] sm:$0xff]
      %v670 = vld [vmem:[%s7 + $0x8] sm:$0xff]
      %v671 = vld [vmem:[%s7 + $0x10] sm:$0xf]
      %673 = vset.pattern.permute.xlu0 0
      %674 = vperm.xlu0 %673, %v669
      %v675 = vpop.permute.xlu0 %674
      %678 = vset.pattern.permute.xlu0 0
      %679 = vperm.xlu0 %678, %v670
      %v680 = vpop.permute.xlu0 %679
      %683 = vset.pattern.permute.xlu0 0
      %684 = vperm.xlu0 %683, %v671
      %v685 = vpop.permute.xlu0 %684
      %vm687 = vcmask 326656
      %v689 = vsel %vm687, %v656, 0
      %v692 = vsel %vm687, %v657, 0
      %v695 = vsel %vm687, %v658, 0
      %697 = vmatprep.subr.mxu0 0.0
      %698 = vmatpush1.msra.mxu0 0.0
      %699 = vmatprep.subr.mxu0 0.0
      %700 = vmatpush1.msra.mxu0 0.0
      %701 = vmatprep.subr.mxu0 0.0
      %702 = vmatpush1.msra.mxu0 0.0
      %703 = vmatprep.subr.mxu0 0.0
      %704 = vmatpush1.msra.mxu0 0.0
      %705 = vmatprep.subr.mxu0 0.0
      %706 = vmatpush1.msra.mxu0 0.0
      %707 = vmatprep.subr.mxu0 0.0
      %708 = vmatpush1.msra.mxu0 0.0
      %709 = vmatprep.subr.mxu0 0.0
      %710 = vmatpush1.msra.mxu0 0.0
      %711 = vmatprep.subr.mxu0 0.0
      %712 = vmatpush1.msra.mxu0 0.0
      %713 = vmatprep.subr.mxu0 0.0
      %714 = vmatpush1.msra.mxu0 0.0
      %715 = vmatprep.subr.mxu0 0.0
      %716 = vmatpush1.msra.mxu0 0.0
      %717 = vmatprep.subr.mxu0 0.0
      %718 = vmatpush1.msra.mxu0 0.0
      %719 = vmatprep.subr.mxu0 %v668
      %720 = vmatpush1.msra.mxu0 %v667
      %721 = vmatprep.subr.mxu0 %v666
      %722 = vmatpush1.msra.mxu0 %v665
      %723 = vmatprep.subr.mxu0 %v664
      %724 = vmatpush1.msra.mxu0 %v663
      %725 = vmatprep.subr.mxu0 %v662
      %726 = vmatpush1.msra.mxu0 %v661
      %727 = vmatprep.subr.mxu0 %v660
      %728 = vmatpush1.msra.mxu0 %v659
      %729 = vmatprep.subr.mxu0 0.0
      %730 = vmatpush2.msra.mxu0 0.0
      %731 = vmatprep.subr.mxu0 0.0
      %732 = vmatpush2.msra.mxu0 0.0
      %733 = vmatprep.subr.mxu0 0.0
      %734 = vmatpush2.msra.mxu0 0.0
      %735 = vmatprep.subr.mxu0 0.0
      %736 = vmatpush2.msra.mxu0 0.0
      %737 = vmatprep.subr.mxu0 0.0
      %738 = vmatpush2.msra.mxu0 0.0
      %739 = vmatprep.subr.mxu0 0.0
      %740 = vmatpush2.msra.mxu0 0.0
      %741 = vmatprep.subr.mxu0 0.0
      %742 = vmatpush2.msra.mxu0 0.0
      %743 = vmatprep.subr.mxu0 0.0
      %744 = vmatpush2.msra.mxu0 0.0
      %745 = vmatprep.subr.mxu0 0.0
      %746 = vmatpush2.msra.mxu0 0.0
      %747 = vmatprep.subr.mxu0 0.0
      %748 = vmatpush2.msra.mxu0 0.0
      %749 = vmatprep.subr.mxu0 0.0
      %750 = vmatpush2.msra.mxu0 0.0
      %751 = vmatprep.subr.mxu0 0.0
      %752 = vmatpush2.msra.mxu0 0.0
      %753 = vmatprep.subr.mxu0 0.0
      %754 = vmatpush2.msra.mxu0 0.0
      %755 = vmatprep.subr.mxu0 0.0
      %756 = vmatpush2.msra.mxu0 0.0
      %757 = vmatprep.subr.mxu0 0.0
      %758 = vmatpush2.msra.mxu0 0.0
      %759 = vmatprep.subr.mxu0 0.0
      %760 = vmatpush2.msra.mxu0 0.0
      %761 = vmatprep.mubr.f32.mxu0 0.0
      %762 = vmatmul.mubr.f32.gmra.mxu0 %v689
      %v763 = vpop.f32.mrf.mxu0
      %v764 = vadd.f32 %v675, %v763
      %v765 = vpop.f32.mrf.mxu0
      %v766 = vadd.f32 %v675, %v765
      %767 = vmatprep.mubr.f32.mxu0 0.0
      %768 = vmatmul.mubr.f32.gmra.mxu0 %v692
      %v769 = vpop.f32.mrf.mxu0
      %v770 = vadd.f32 %v680, %v769
      %v771 = vpop.f32.mrf.mxu0
      %v772 = vadd.f32 %v680, %v771
      %773 = vmatprep.mubr.f32.mxu0 0.0
      %774 = vmatmul.mubr.f32.gmra.mxu0 %v695
      %v775 = vpop.f32.mrf.mxu0
      %v776 = vadd.f32 %v685, %v775
      %v777 = vpop.f32.mrf.mxu0
      %v778 = vadd.f32 %v685, %v777
      %779 = vdwg.mxu0
      %v780 = vmax.f32 %v764, 0.0
      %v781 = vmax.f32 %v766, 0.0
      %v782 = vmax.f32 %v770, 0.0
      %v783 = vmax.f32 %v772, 0.0
      %v784 = vmax.f32 %v776, 0.0
      %v785 = vmax.f32 %v778, 0.0
      %v786 = vld [vmem:[%s8] sm:$0xff]
      %v787 = vld [vmem:[%s8 + $0x8] sm:$0x3]
      %v788 = vld [vmem:[%s9] sm:$0xff]
      %v789 = vld [vmem:[%s9 + $0x8] sm:$0x3]
      %791 = vset.pattern.permute.xlu0 0
      %792 = vperm.xlu0 %791, %v788
      %v793 = vpop.permute.xlu0 %792
      %796 = vset.pattern.permute.xlu0 0
      %797 = vperm.xlu0 %796, %v789
      %v798 = vpop.permute.xlu0 %797
      %vm800 = vcmask 162816
      %v802 = vsel %vm800, %v786, 0
      %v805 = vsel %vm800, %v787, 0
      %v808 = vsel %vm618, %v784, 0
      %v811 = vsel %vm618, %v785, 0
      %813 = vmatprep.subr.mxu0 0.0
      %814 = vmatpush1.msra.mxu0 0.0
      %815 = vmatprep.subr.mxu0 0.0
      %816 = vmatpush1.msra.mxu0 0.0
      %817 = vmatprep.subr.mxu0 0.0
      %818 = vmatpush1.msra.mxu0 0.0
      %819 = vmatprep.subr.mxu0 0.0
      %820 = vmatpush1.msra.mxu0 0.0
      %821 = vmatprep.subr.mxu0 0.0
      %822 = vmatpush1.msra.mxu0 0.0
      %823 = vmatprep.subr.mxu0 0.0
      %824 = vmatpush1.msra.mxu0 0.0
      %825 = vmatprep.subr.mxu0 0.0
      %826 = vmatpush1.msra.mxu0 0.0
      %827 = vmatprep.subr.mxu0 0.0
      %828 = vmatpush1.msra.mxu0 0.0
      %829 = vmatprep.subr.mxu0 0.0
      %830 = vmatpush1.msra.mxu0 0.0
      %831 = vmatprep.subr.mxu0 0.0
      %832 = vmatpush1.msra.mxu0 0.0
      %833 = vmatprep.subr.mxu0 0.0
      %834 = vmatpush1.msra.mxu0 0.0
      %835 = vmatprep.subr.mxu0 0.0
      %836 = vmatpush1.msra.mxu0 0.0
      %837 = vmatprep.subr.mxu0 0.0
      %838 = vmatpush1.msra.mxu0 0.0
      %839 = vmatprep.subr.mxu0 %v811
      %840 = vmatpush1.msra.mxu0 %v808
      %841 = vmatprep.subr.mxu0 %v783
      %842 = vmatpush1.msra.mxu0 %v782
      %843 = vmatprep.subr.mxu0 %v781
      %844 = vmatpush1.msra.mxu0 %v780
      %845 = vmatprep.subr.mxu0 0.0
      %846 = vmatpush2.msra.mxu0 0.0
      %847 = vmatprep.subr.mxu0 0.0
      %848 = vmatpush2.msra.mxu0 0.0
      %849 = vmatprep.subr.mxu0 0.0
      %850 = vmatpush2.msra.mxu0 0.0
      %851 = vmatprep.subr.mxu0 0.0
      %852 = vmatpush2.msra.mxu0 0.0
      %853 = vmatprep.subr.mxu0 0.0
      %854 = vmatpush2.msra.mxu0 0.0
      %855 = vmatprep.subr.mxu0 0.0
      %856 = vmatpush2.msra.mxu0 0.0
      %857 = vmatprep.subr.mxu0 0.0
      %858 = vmatpush2.msra.mxu0 0.0
      %859 = vmatprep.subr.mxu0 0.0
      %860 = vmatpush2.msra.mxu0 0.0
      %861 = vmatprep.subr.mxu0 0.0
      %862 = vmatpush2.msra.mxu0 0.0
      %863 = vmatprep.subr.mxu0 0.0
      %864 = vmatpush2.msra.mxu0 0.0
      %865 = vmatprep.subr.mxu0 0.0
      %866 = vmatpush2.msra.mxu0 0.0
      %867 = vmatprep.subr.mxu0 0.0
      %868 = vmatpush2.msra.mxu0 0.0
      %869 = vmatprep.subr.mxu0 0.0
      %870 = vmatpush2.msra.mxu0 0.0
      %871 = vmatprep.subr.mxu0 0.0
      %872 = vmatpush2.msra.mxu0 0.0
      %873 = vmatprep.subr.mxu0 0.0
      %874 = vmatpush2.msra.mxu0 0.0
      %875 = vmatprep.subr.mxu0 0.0
      %876 = vmatpush2.msra.mxu0 0.0
      %877 = vmatprep.mubr.f32.mxu0 0.0
      %878 = vmatmul.mubr.f32.gmra.mxu0 %v802
      %v879 = vpop.f32.mrf.mxu0
      %v880 = vadd.f32 %v793, %v879
      %v881 = vpop.f32.mrf.mxu0
      %v882 = vadd.f32 %v793, %v881
      %883 = vmatprep.mubr.f32.mxu0 0.0
      %884 = vmatmul.mubr.f32.gmra.mxu0 %v805
      %v885 = vpop.f32.mrf.mxu0
      %v886 = vadd.f32 %v798, %v885
      %v887 = vpop.f32.mrf.mxu0
      %v888 = vadd.f32 %v798, %v887
      %889 = vdwg.mxu0
      %v890 = vmax.f32 %v880, 0.0
      %v891 = vmax.f32 %v882, 0.0
      %v892 = vmax.f32 %v886, 0.0
      %v893 = vmax.f32 %v888, 0.0
      %v894 = vld [vmem:[%s557] sm:$0xff]
      %v895 = vld [vmem:[%s557 + $0x8] sm:$0xff]
      %v896 = vld [vmem:[%s557 + $0x10] sm:$0x3]
      %v897 = vld [vmem:[%s557 + $0x18] sm:$0x3]
      %v898 = vadd.f32 %v890, %v894
      %v899 = vadd.f32 %v891, %v895
      %v900 = vadd.f32 %v892, %v896
      %v901 = vadd.f32 %v893, %v897
      %v902 = vld [vmem:[%s567] sm:$0xff]
      %v903 = vld [vmem:[%s567 + $0x8] sm:$0xff]
      %v904 = vld [vmem:[%s567 + $0x10] sm:$0x3]
      %v905 = vld [vmem:[%s567 + $0x18] sm:$0x3]
      %v906 = vadd.f32 %v898, %v902
      %v907 = vadd.f32 %v899, %v903
      %v908 = vadd.f32 %v900, %v904
      %v909 = vadd.f32 %v901, %v905
      %910 = vst [vmem:[%s577] sm:$0xff] %v906
      %911 = vst [vmem:[%s577 + $0x8] sm:$0xff] %v907
      %912 = vst [vmem:[%s577 + $0x10] sm:$0x3] %v908
      %913 = vst [vmem:[%s577 + $0x18] sm:$0x3] %v909
      %s914 = smul.u32 2, %s26
      %p915 = scmp.lt.s32.totalorder %s25, 1
      %s916 = scalar_select %p915, %s25, 1
      %p917 = scmp.lt.s32.totalorder %s914, 1
      %s918 = scalar_select %p917, %s914, 1
      %s919 = smul.addr %s916, 4
      %s920 = sadd.s32 %s918, %s919
      %s921 = smul.addr %s920, 8
      %s922 = scalar_lea.vmem %s10, %s921
      // Predicated region
      $region61: #{tpu_custom_call.1} parent=59 // pred_check
        %p923 = pneg %p305
      $region62: #{tpu_custom_call.1} parent=59 // pred_check_branch
        %925 = sbr.rel (%p923) target = $region64
      $region63: #{tpu_custom_call.1} parent=59 // pred_region
        %s926 = smul.u32 2, %s26
      $region64: #{tpu_custom_call.1} parent=59 // pred_fallthru
        _
    $region60: #{tpu_custom_call.1} parent=5 // pred_fallthru
      _
    %p927 = scmp.le.s32.totalorder 2, %s16
    // Predicated region
    $region65: #{tpu_custom_call.1} parent=5 // pred_check
      %p928 = pneg %p927
    $region66: #{tpu_custom_call.1} parent=5 // pred_check_branch
      %930 = sbr.rel (%p928) target = $region68
    $region67: #{tpu_custom_call.1} parent=5 // pred_region
      %s931 = ssub.s32 %s16, 2
      // Predicated region
      $region69: #{tpu_custom_call.1} parent=67 // pred_check
        %p932 = pneg %p311
      $region70: #{tpu_custom_call.1} parent=67 // pred_check_branch
        %934 = sbr.rel (%p932) target = $region72
      $region71: #{tpu_custom_call.1} parent=67 // pred_region
        %s935 = smul.u32 2, %s28
        %p936 = scmp.lt.s32.totalorder %s27, 1
        %s937 = scalar_select %p936, %s27, 1
        %p938 = scmp.lt.s32.totalorder %s935, 1
        %s939 = scalar_select %p938, %s935, 1
        %s940 = smul.addr %s937, 4
        %s941 = sadd.s32 %s939, %s940
        %s942 = smul.addr %s941, 8
        %s943 = scalar_lea.vmem %s10, %s942
      $region72: #{tpu_custom_call.1} parent=67 // pred_fallthru
        _
    $region68: #{tpu_custom_call.1} parent=5 // pred_fallthru
      _
  $region6: #{tpu_custom_call.1} parent=0 // loop_footer
    %s20 = sadd.s32 1, %s16
  $region7: #{tpu_custom_call.1} parent=0 // loop_footer_branch
    %15 = sbr.rel target = $region3
  $region8: #{tpu_custom_call.1} parent=0 // loop_exit
    _

</llo_original>
